<compile_context>
chip_gen: v7x
topology: tpu7x:2x2x1
jax: 0.10.0
libtpu: 0.0.40
codegen_flags: <defaults>
</compile_context>

<pallas_src>
import functools

import jax
import jax.numpy as jnp
from jax import lax
from jax.experimental import pallas as pl
from jax.experimental.pallas import tpu as pltpu


def _taylor_ce_kernel(n_rows, n_cols, tm, tc, has_col_tail, use_mxu, *refs):
    if use_mxu:
        x_ref, lab_ref, ones_ref, o_ref, num_acc, den_acc = refs
    else:
        x_ref, lab_ref, o_ref, num_acc, den_acc = refs
        ones_ref = None

    i = pl.program_id(0)                 # row tile   (parallel)
    j = pl.program_id(1)                 # class tile (reduction)
    last_j = pl.num_programs(1) - 1

    @pl.when(j == 0)
    def _():
        num_acc[...] = jnp.zeros_like(num_acc)
        den_acc[...] = jnp.zeros_like(den_acc)

    x = x_ref[...].astype(jnp.float32)            # (tm, tc), f32 math
    t = 1.0 + x + x * x                           # taylor_exp

    # j-independent iota: fold the class-tile offset into the (tm, 1) labels
    # (and into the scalar tail bound) instead of adding j*tc to a full tile.
    base_col = lax.broadcasted_iota(jnp.int32, (tm, tc), 1)
    onehot = base_col == (lab_ref[...] - j * tc)          # (tm,1) bcast over tc
    masked_num = jnp.where(onehot, t, 0.0)

    def _row_sum(v):
        if use_mxu:
            # Offload the lane reduction to the otherwise-idle MXU.
            return jnp.dot(v, ones_ref[...],
                           preferred_element_type=jnp.float32,
                           precision=lax.Precision.HIGHEST)[:, :1]
        return jnp.sum(v, axis=1, keepdims=True)

    # gather(dim=1, index=labels) via one-hot masked row-sum; partial sums
    # over class tiles accumulate in per-row VMEM scratch.
    num_acc[...] += _row_sum(masked_num)

    if has_col_tail:
        # Only the statically-known tail class tile pays the padding mask.
        @pl.when(j == last_j)
        def _():
            valid_col = base_col < (n_cols - j * tc)
            den_acc[...] += jnp.sum(jnp.where(valid_col, t, 0.0),
                                    axis=1, keepdims=True)

        @pl.when(j < last_j)
        def _():
            den_acc[...] += _row_sum(t)
    else:
        den_acc[...] += _row_sum(t)

    @pl.when(j == last_j)
    def _():
        row = lax.broadcasted_iota(jnp.int32, (tm, 1), 0) + i * tm
        ratio = jnp.where(row < n_rows, num_acc[...] / den_acc[...], 0.0)
        # Lane-dense per-row-tile partial sum; final mean happens outside.
        o_ref[...] = jnp.full((1, 8, 128), jnp.sum(ratio), dtype=jnp.float32)


def _vmem_budget(itemsize):
    """Returns (per-buffer logits-tile element budget, vmem_limit_bytes)."""
    cap = 64 * 1024 * 1024                       # conservative default (v7x per-TC)
    try:
        info = pltpu.get_tpu_info()
        cap = int(getattr(info, "vmem_capacity_bytes", cap)) or cap
    except Exception:
        pass
    vmem_limit = min(cap * 3 // 4, 96 * 1024 * 1024)   # 96 MiB on v5e/v6e, 48 MiB on v7x
    # Per grid step we hold 2x the input tile (double-buffered DMA) plus
    # roughly five full-tile f32/i32 temporaries (cast, t, iota, selects).
    # Keep that within ~55% of the limit to leave headroom for labels, the
    # output, accumulators, the optional MXU ones/dot result, and Mosaic
    # internal scratch.
    max_elems = (vmem_limit * 11 // 20) // (2 * itemsize + 20)
    return max_elems, vmem_limit


def _choose_tiles(n, c, itemsize, max_elems):
    """Pick (tm, tc): tm multiple of the packed-sublane count; tc == c or a
    multiple of 128."""
    sub = max(8, 32 // itemsize)                 # 8 f32, 16 bf16, 32 int8/fp8
    rup = lambda v, m: -(-v // m) * m
    n_pad = rup(n, sub)

    tm_full_c = (max_elems // c) // sub * sub
    if tm_full_c >= 256:
        # Small / medium C: whole class dim per tile; size tm by bytes.
        tc = c
        tm = max(sub, min(n_pad, tm_full_c))
        # Keep >=4 (else >=2) row tiles so both v7x TensorCores get work,
        # as long as tiles stay >= ~512K elements (multi-MiB DMAs).
        min_rows = max(sub, rup(pl.cdiv(512 * 1024, c), sub))
        for parts in (4, 2):
            cand = rup(pl.cdiv(n, parts), sub)
            if cand >= min_rows:
                tm = min(tm, cand)
                break
    else:
        # Vocab-scale C: tile the class dim too (multiples of 128 lanes).
        tm = max(sub, min(n_pad, rup(512, sub)))
        tc = max(128, (max_elems // tm) // 128 * 128)
        tc = min(tc, rup(c, 128))
    return tm, tc


def taylor_cross_entropy_loss(logits, labels, *, tm=None, tc=None, use_mxu=None):
    """logits: (N, C) float (f32 or bf16), labels: (N,) int. Scalar f32 loss.

    Out-of-range labels contribute 0 to the numerator (torch.gather would
    raise) — documented behaviour.
    """
    n, c = logits.shape
    itemsize = jnp.dtype(logits.dtype).itemsize
    max_elems, vmem_limit = _vmem_budget(itemsize)
    auto_tm, auto_tc = _choose_tiles(n, c, itemsize, max_elems)
    tm = auto_tm if tm is None else tm
    tc = auto_tc if tc is None else tc
    assert tm % 8 == 0, "row tile must be a multiple of 8 (16 for bf16)"
    assert tc == c or tc % 128 == 0, "class tile must be C or a multiple of 128"

    has_col_tail = (c % tc) != 0
    if use_mxu is None:
        # Offload lane reductions to the MXU only when the class tile is wide
        # enough to matter and the ones matrix + dot result stay <= ~4 MiB.
        use_mxu = (tc >= 512) and ((tm + tc) * 512 <= 4 * 1024 * 1024)

    grid = (pl.cdiv(n, tm), pl.cdiv(c, tc))
    labels2d = labels.astype(jnp.int32).reshape(n, 1)

    inputs = [logits, labels2d]
    in_specs = [
        pl.BlockSpec((tm, tc), lambda i, j: (i, j)),   # logits tile
        pl.BlockSpec((tm, 1), lambda i, j: (i, 0)),    # labels tile
    ]
    if use_mxu:
        # Resident ones matrix for the MXU reduction (constant block index ->
        # fetched once, reused across the whole grid).
        inputs.append(jnp.ones((tc, 128), dtype=jnp.float32))
        in_specs.append(pl.BlockSpec((tc, 128), lambda i, j: (0, 0)))

    kernel = functools.partial(_taylor_ce_kernel, n, c, tm, tc,
                               has_col_tail, use_mxu)

    partial_sums = pl.pallas_call(
        kernel,
        out_shape=jax.ShapeDtypeStruct((grid[0], 8, 128), jnp.float32),
        grid_spec=pltpu.PrefetchScalarGridSpec(
            num_scalar_prefetch=0,
            grid=grid,
            in_specs=in_specs,
            out_specs=pl.BlockSpec((1, 8, 128), lambda i, j: (i, 0, 0)),
            scratch_shapes=[
                pltpu.VMEM((tm, 1), jnp.float32),   # per-row numerator acc
                pltpu.VMEM((tm, 1), jnp.float32),   # per-row denominator acc
            ],
        ),
        compiler_params=pltpu.CompilerParams(
            dimension_semantics=("parallel", "arbitrary"),
            vmem_limit_bytes=int(vmem_limit),
        ),
    )(*inputs)

    # Final mean over per-row-tile partial sums, done in plain JAX (f32).
    return jnp.sum(partial_sums[:, 0, 0]) / jnp.float32(n)


def _reference(logits, labels):
    x = logits.astype(jnp.float32)
    t = 1.0 + x + x * x
    num = jnp.take_along_axis(t, labels.reshape(-1, 1).astype(jnp.int32), axis=1)[:, 0]
    den = jnp.sum(t, axis=1)
    return jnp.mean(num / den)


if __name__ == "__main__":
    key = jax.random.PRNGKey(0)
    k1, k2, k3, k4, k5, k6, k7, k8 = jax.random.split(key, 8)

    # Test 1: small f32 case, auto tiling (single tile, grid (1, 1), VPU path).
    N1, C1 = 16, 128
    logits1 = jax.random.normal(k1, (N1, C1), dtype=jnp.float32)
    labels1 = jax.random.randint(k2, (N1,), 0, C1, dtype=jnp.int32)
    loss1 = jax.block_until_ready(taylor_cross_entropy_loss(logits1, labels1))
    ref1 = _reference(logits1, labels1)
    assert jnp.allclose(loss1, ref1, rtol=1e-5, atol=1e-6), (loss1, ref1)

    # Test 2: bf16 logits, ragged N/C exercising row-tail + class-tail masking
    # and the class reduction axis (tiles forced small: grid (2, 2), VPU path,
    # tm is a multiple of 16 to match bf16 sublane packing).
    N2, C2 = 20, 200
    logits2 = jax.random.normal(k3, (N2, C2), dtype=jnp.float32).astype(jnp.bfloat16)
    labels2 = jax.random.randint(k4, (N2,), 0, C2, dtype=jnp.int32)
    loss2 = jax.block_until_ready(
        taylor_cross_entropy_loss(logits2, labels2, tm=16, tc=128))
    ref2 = _reference(logits2, labels2)
    assert jnp.allclose(loss2, ref2, rtol=1e-4, atol=1e-5), (loss2, ref2)

    # Test 3: MXU-offloaded lane reduction, full-C tile (grid (1, 1)).
    N3, C3 = 64, 640
    logits3 = jax.random.normal(k5, (N3, C3), dtype=jnp.float32)
    labels3 = jax.random.randint(k6, (N3,), 0, C3, dtype=jnp.int32)
    loss3 = jax.block_until_ready(
        taylor_cross_entropy_loss(logits3, labels3, use_mxu=True))
    ref3 = _reference(logits3, labels3)
    assert jnp.allclose(loss3, ref3, rtol=1e-4, atol=1e-6), (loss3, ref3)

    # Test 4: MXU path on full class tiles + masked VPU path on the class
    # tail, with a row tail (grid (2, 2)).
    N4, C4 = 24, 200
    logits4 = jax.random.normal(k7, (N4, C4), dtype=jnp.float32)
    labels4 = jax.random.randint(k8, (N4,), 0, C4, dtype=jnp.int32)
    loss4 = jax.block_until_ready(
        taylor_cross_entropy_loss(logits4, labels4, tm=16, tc=128, use_mxu=True))
    ref4 = _reference(logits4, labels4)
    assert jnp.allclose(loss4, ref4, rtol=1e-4, atol=1e-6), (loss4, ref4)

    print("KERNEL_OK")
</pallas_src>

<mosaic_0001>
module attributes {stable_mosaic.version = 11 : i64} {
  func.func @_taylor_ce_kernel(%arg0: i32, %arg1: i32, %arg2: memref<16x128xf32, #tpu.memory_space<vmem>>, %arg3: memref<16x1xi32, #tpu.memory_space<vmem>>, %arg4: memref<1x8x128xf32, #tpu.memory_space<vmem>>, %arg5: memref<16x1xf32, #tpu.memory_space<vmem>>, %arg6: memref<16x1xf32, #tpu.memory_space<vmem>>) attributes {dimension_semantics = [#tpu.dimension_semantics<parallel>, #tpu.dimension_semantics<arbitrary>], iteration_bounds = array<i64: 1, 1>, scalar_prefetch = 0 : i64, scratch_operands = 2 : i64, tpu.core_type = #tpu.core_type<tc>, window_params = [{transform_indices = @transform_0, window_bounds = array<i64: 16, 128>}, {transform_indices = @transform_1, window_bounds = array<i64: 16, 1>}, {transform_indices = @transform_2, window_bounds = array<i64: 1, 8, 128>}]} {
    %c0_i32 = arith.constant 0 : i32
    %0 = arith.cmpi eq, %arg1, %c0_i32 : i32
    %1 = arith.extui %0 : i1 to i32
    %c0_i32_0 = arith.constant 0 : i32
    %2 = arith.cmpi ne, %1, %c0_i32_0 : i32
    scf.if %2 {
      %cst_17 = arith.constant 0.000000e+00 : f32
      %30 = vector.broadcast %cst_17 : f32 to vector<16x1xf32>
      %c0_18 = arith.constant 0 : index
      %c0_19 = arith.constant 0 : index
      %31 = vector.load %arg5[%c0_18, %c0_19] : memref<16x1xf32, #tpu.memory_space<vmem>>, vector<16x1xf32>
      tpu.vector_store %arg5[%c0_18, %c0_19], %30 {strides = array<i32>} : memref<16x1xf32, #tpu.memory_space<vmem>>, vector<16x1xf32>,
      %cst_20 = arith.constant 0.000000e+00 : f32
      %32 = vector.broadcast %cst_20 : f32 to vector<16x1xf32>
      %c0_21 = arith.constant 0 : index
      %c0_22 = arith.constant 0 : index
      %33 = vector.load %arg6[%c0_21, %c0_22] : memref<16x1xf32, #tpu.memory_space<vmem>>, vector<16x1xf32>
      tpu.vector_store %arg6[%c0_21, %c0_22], %32 {strides = array<i32>} : memref<16x1xf32, #tpu.memory_space<vmem>>, vector<16x1xf32>,
    } else {
    }
    %c0 = arith.constant 0 : index
    %c0_1 = arith.constant 0 : index
    %3 = vector.load %arg2[%c0, %c0_1] : memref<16x128xf32, #tpu.memory_space<vmem>>, vector<16x128xf32>
    %cst = arith.constant 1.000000e+00 : f32
    %4 = vector.broadcast %cst : f32 to vector<16x128xf32>
    %5 = arith.addf %4, %3 : vector<16x128xf32>
    %6 = arith.mulf %3, %3 : vector<16x128xf32>
    %7 = arith.addf %5, %6 : vector<16x128xf32>
    %8 = tpu.iota {dimensions = array<i32: 1>} : vector<16x128xi32>
    %c0_2 = arith.constant 0 : index
    %c0_3 = arith.constant 0 : index
    %9 = vector.load %arg3[%c0_2, %c0_3] : memref<16x1xi32, #tpu.memory_space<vmem>>, vector<16x1xi32>
    %c128_i32 = arith.constant 128 : i32
    %10 = arith.muli %arg1, %c128_i32 : i32
    %11 = vector.broadcast %10 : i32 to vector<16x1xi32>
    %12 = arith.subi %9, %11 : vector<16x1xi32>
    %13 = vector.broadcast %12 : vector<16x1xi32> to vector<16x128xi32>
    %14 = arith.cmpi eq, %8, %13 : vector<16x128xi32>
    %cst_4 = arith.constant 0.000000e+00 : f32
    %15 = vector.broadcast %cst_4 : f32 to vector<16x128xf32>
    %16 = arith.select %14, %7, %15 : vector<16x128xi1>, vector<16x128xf32>
    %c0_5 = arith.constant 0 : index
    %c0_6 = arith.constant 0 : index
    %17 = vector.load %arg5[%c0_5, %c0_6] : memref<16x1xf32, #tpu.memory_space<vmem>>, vector<16x1xf32>
    %cst_7 = arith.constant dense<0.000000e+00> : vector<16xf32>
    %18 = vector.multi_reduction <add>, %16, %cst_7 [1] : vector<16x128xf32> to vector<16xf32>
    %19 = vector.shape_cast %18 : vector<16xf32> to vector<16x1xf32>
    %20 = arith.addf %17, %19 : vector<16x1xf32>
    %c0_8 = arith.constant 0 : index
    %c0_9 = arith.constant 0 : index
    %21 = vector.load %arg5[%c0_8, %c0_9] : memref<16x1xf32, #tpu.memory_space<vmem>>, vector<16x1xf32>
    tpu.vector_store %arg5[%c0_8, %c0_9], %20 {strides = array<i32>} : memref<16x1xf32, #tpu.memory_space<vmem>>, vector<16x1xf32>,
    %c0_10 = arith.constant 0 : index
    %c0_11 = arith.constant 0 : index
    %22 = vector.load %arg6[%c0_10, %c0_11] : memref<16x1xf32, #tpu.memory_space<vmem>>, vector<16x1xf32>
    %cst_12 = arith.constant dense<0.000000e+00> : vector<16xf32>
    %23 = vector.multi_reduction <add>, %7, %cst_12 [1] : vector<16x128xf32> to vector<16xf32>
    %24 = vector.shape_cast %23 : vector<16xf32> to vector<16x1xf32>
    %25 = arith.addf %22, %24 : vector<16x1xf32>
    %c0_13 = arith.constant 0 : index
    %c0_14 = arith.constant 0 : index
    %26 = vector.load %arg6[%c0_13, %c0_14] : memref<16x1xf32, #tpu.memory_space<vmem>>, vector<16x1xf32>
    tpu.vector_store %arg6[%c0_13, %c0_14], %25 {strides = array<i32>} : memref<16x1xf32, #tpu.memory_space<vmem>>, vector<16x1xf32>,
    %c0_i32_15 = arith.constant 0 : i32
    %27 = arith.cmpi eq, %arg1, %c0_i32_15 : i32
    %28 = arith.extui %27 : i1 to i32
    %c0_i32_16 = arith.constant 0 : i32
    %29 = arith.cmpi ne, %28, %c0_i32_16 : i32
    scf.if %29 {
      %30 = tpu.iota {dimensions = array<i32: 0>} : vector<16x1xi32>
      %c16_i32 = arith.constant 16 : i32
      %31 = arith.muli %arg0, %c16_i32 : i32
      %32 = vector.broadcast %31 : i32 to vector<16x1xi32>
      %33 = arith.addi %30, %32 : vector<16x1xi32>
      %c16_i32_17 = arith.constant 16 : i32
      %34 = vector.broadcast %c16_i32_17 : i32 to vector<16x1xi32>
      %35 = arith.cmpi slt, %33, %34 : vector<16x1xi32>
      %c0_18 = arith.constant 0 : index
      %c0_19 = arith.constant 0 : index
      %36 = vector.load %arg5[%c0_18, %c0_19] : memref<16x1xf32, #tpu.memory_space<vmem>>, vector<16x1xf32>
      %c0_20 = arith.constant 0 : index
      %c0_21 = arith.constant 0 : index
      %37 = vector.load %arg6[%c0_20, %c0_21] : memref<16x1xf32, #tpu.memory_space<vmem>>, vector<16x1xf32>
      %38 = arith.divf %36, %37 : vector<16x1xf32>
      %cst_22 = arith.constant 0.000000e+00 : f32
      %39 = vector.broadcast %cst_22 : f32 to vector<16x1xf32>
      %40 = arith.select %35, %38, %39 : vector<16x1xi1>, vector<16x1xf32>
      %41 = vector.shape_cast %40 : vector<16x1xf32> to vector<1x16x1xf32>
      %cst_23 = arith.constant dense<0.000000e+00> : vector<1xf32>
      %42 = vector.multi_reduction <add>, %41, %cst_23 [1, 2] : vector<1x16x1xf32> to vector<1xf32>
      %43 = vector.shape_cast %42 : vector<1xf32> to vector<1x1x1xf32>
      %44 = vector.extract %43[0, 0, 0] : f32 from vector<1x1x1xf32>
      %45 = vector.broadcast %44 : f32 to vector<1x8x128xf32>
      %c0_24 = arith.constant 0 : index
      %c0_25 = arith.constant 0 : index
      %c0_26 = arith.constant 0 : index
      %46 = vector.load %arg4[%c0_24, %c0_25, %c0_26] : memref<1x8x128xf32, #tpu.memory_space<vmem>>, vector<1x8x128xf32>
      tpu.vector_store %arg4[%c0_24, %c0_25, %c0_26], %45 {strides = array<i32>} : memref<1x8x128xf32, #tpu.memory_space<vmem>>, vector<1x8x128xf32>,
    } else {
    }
    return
  }
  func.func @transform_0(%arg0: i32, %arg1: i32) -> (i32, i32) {
    %c0_i32 = arith.constant 0 : i32
    return %arg0, %arg1 : i32, i32
  }
  func.func @transform_1(%arg0: i32, %arg1: i32) -> (i32, i32) {
    %c0_i32 = arith.constant 0 : i32
    %c0_i32_0 = arith.constant 0 : i32
    return %arg0, %c0_i32 : i32, i32
  }
  func.func @transform_2(%arg0: i32, %arg1: i32) -> (i32, i32, i32) {
    %c0_i32 = arith.constant 0 : i32
    %c0_i32_0 = arith.constant 0 : i32
    %c0_i32_1 = arith.constant 0 : i32
    return %arg0, %c0_i32, %c0_i32_0 : i32, i32, i32
  }
}

</mosaic_0001>

<llo_original>
// kernel: tpu_custom_call.1
$region0: #{tpu_custom_call.1}
  #allocation0 [shape = 'u32[]', space=smem, size = 0x4, offset = 0x4, fixed_abs, tag = 'smem constant byte address 0x4 - core index']
  #allocation1 [shape = 'u32[144,128]{1,0:T(1,128)}', space=vmem, size = 0x12000, scoped, tag = 'internal scratch']
  #allocation2 [shape = 'f32[16,1]{1,0:T(8,128)}', space=vmem, size = 0x2000, scoped, tag = 'scratch operand']
  #allocation3 [shape = 'f32[16,1]{1,0:T(8,128)}', space=vmem, size = 0x2000, scoped, tag = 'scratch operand']
  %s0 = inlined_call_operand.vmem [shape: f32[16,128], index: 0, kind: input, shape index: {}]
  %s1 = inlined_call_operand.vmem [shape: s32[16,1], index: 1, kind: input, shape index: {}]
  %s2 = inlined_call_operand.hbm [shape: f32[1,8,128], index: 2, kind: output, shape index: {}]
  %s3 = sld [smem:[#allocation0]]
  $region26: #{tpu_custom_call.1} parent=0
    _
  %s5 = ssub.s32 1, %s3
  %s6 = scalar_select 0, %s5, %s3
  $region1: #{tpu_custom_call.1} parent=0
    #allocation4 [shape = 'u8[4096]{0}', space=vmem, size = 0x1000, scoped, tag = 'output window, operand 0, single buffered']
    #allocation5 [shape = 's32[1]{0}', space=sflag, size = 0x4, scoped, tag = 'scoped memory for tpu_custom_call.1']
    %7 = vsyncpa [#allocation5], 0
    // Predicated region
    $region2: #{tpu_custom_call.1} parent=1 // pred_check
      _
    $region3: #{tpu_custom_call.1} parent=1 // pred_check_branch
      %9 = sbr.rel (0) target = $region5
    $region4: #{tpu_custom_call.1} parent=1 // pred_region
      _
    $region5: #{tpu_custom_call.1} parent=1 // pred_fallthru
      _
    // Predicated region
    $region6: #{tpu_custom_call.1} parent=1 // pred_check
      _
    $region7: #{tpu_custom_call.1} parent=1 // pred_check_branch
      %11 = sbr.rel (0) target = $region9
    $region8: #{tpu_custom_call.1} parent=1 // pred_region
      _
    $region9: #{tpu_custom_call.1} parent=1 // pred_fallthru
      _
    %p12 = scmp.eq.s32.totalorder 0, 0
    // Predicated region
    $region10: #{tpu_custom_call.1} parent=1 // pred_check
      %p13 = pneg %p12
    $region11: #{tpu_custom_call.1} parent=1 // pred_check_branch
      %15 = sbr.rel (%p13) target = $region13
    $region12: #{tpu_custom_call.1} parent=1 // pred_region
      %vm16 = vcmask 7168
      %17 = vst.msk [vmem:[#allocation2] sm:$0xff] %vm16, 0.0
      %18 = vst.msk [vmem:[#allocation2 + $0x8] sm:$0xff] %vm16, 0.0
      %19 = vst.msk [vmem:[#allocation3] sm:$0xff] %vm16, 0.0
      %20 = vst.msk [vmem:[#allocation3 + $0x8] sm:$0xff] %vm16, 0.0
    $region13: #{tpu_custom_call.1} parent=1 // pred_fallthru
      _
    %v21 = vld [vmem:[%s0] sm:$0xff]
    %v22 = vld [vmem:[%s0 + $0x8] sm:$0xff]
    %v23 = vadd.f32 %v21, 1.0
    %v24 = vadd.f32 %v22, 1.0
    %v25 = vmul.f32 %v21, %v21
    %v26 = vmul.f32 %v22, %v22
    %v27 = vadd.f32 %v23, %v25
    %v28 = vadd.f32 %v24, %v26
    %v29 = vlaneseq
    %v30 = vand.u32 %v29, 127
    %v31 = vld [vmem:[%s1] sm:$0xff]
    %v32 = vld [vmem:[%s1 + $0x8] sm:$0xff]
    %s33 = smul.u32 0, 128
    %v34 = vstv %s33
    %v35 = vsub.s32 %v31, %v34
    %v36 = vsub.s32 %v32, %v34
    %37 = vset.pattern.permute.xlu0 0
    %38 = vperm.xlu0 %37, %v35
    %v39 = vpop.permute.xlu0 %38
    %40 = vset.pattern.permute.xlu0 0
    %41 = vperm.xlu0 %40, %v36
    %v42 = vpop.permute.xlu0 %41
    %vm43 = vcmp.eq.s32.totalorder %v30, %v39
    %vm44 = vcmp.eq.s32.totalorder %v30, %v42
    %v45 = vsel %vm43, %v27, 0.0
    %v46 = vsel %vm44, %v28, 0.0
    %v47 = vld [vmem:[#allocation2] sm:$0xff]
    %v48 = vld [vmem:[#allocation2 + $0x8] sm:$0xff]
    %49 = vadd.xlane.f32.xlu0 %v45
    %v50 = vpop.xlane.xlu0 %49
    %51 = vadd.xlane.f32.xlu0 %v46
    %v52 = vpop.xlane.xlu0 %51
    %v53 = vadd.f32 %v47, %v50
    %v54 = vadd.f32 %v48, %v52
    %vm55 = vcmask 7168
    %56 = vst.msk [vmem:[#allocation2] sm:$0xff] %vm55, %v53
    %57 = vst.msk [vmem:[#allocation2 + $0x8] sm:$0xff] %vm55, %v54
    %v58 = vld [vmem:[#allocation3] sm:$0xff]
    %v59 = vld [vmem:[#allocation3 + $0x8] sm:$0xff]
    %60 = vadd.xlane.f32.xlu0 %v27
    %v61 = vpop.xlane.xlu0 %60
    %62 = vadd.xlane.f32.xlu0 %v28
    %v63 = vpop.xlane.xlu0 %62
    %v64 = vadd.f32 %v58, %v61
    %v65 = vadd.f32 %v59, %v63
    %66 = vst.msk [vmem:[#allocation3] sm:$0xff] %vm55, %v64
    %67 = vst.msk [vmem:[#allocation3 + $0x8] sm:$0xff] %vm55, %v65
    // Predicated region
    $region14: #{tpu_custom_call.1} parent=1 // pred_check
      %p68 = pneg %p12
    $region15: #{tpu_custom_call.1} parent=1 // pred_check_branch
      %70 = sbr.rel (%p68) target = $region17
    $region16: #{tpu_custom_call.1} parent=1 // pred_region
      %v71 = vlaneseq
      %v72 = vshrl.u32 %v71, 7
      %v73 = vadd.s32 %v72, 8
      %s74 = smul.u32 0, 16
      %v75 = vstv %s74
      %v76 = vadd.s32 %v72, %v75
      %v77 = vadd.s32 %v73, %v75
      %vm78 = vcmp.lt.s32.totalorder %v76, 16
      %vm79 = vcmp.lt.s32.totalorder %v77, 16
      %v80 = vld [vmem:[#allocation2] sm:$0xff]
      %v81 = vld [vmem:[#allocation2 + $0x8] sm:$0xff]
      %v82 = vld [vmem:[#allocation3] sm:$0xff]
      %v83 = vld [vmem:[#allocation3 + $0x8] sm:$0xff]
      %v84 = vrcp.pop %v82
      %v85 = vmul.f32 %v80, %v84
      %v86 = vrcp.pop %v83
      %v87 = vmul.f32 %v81, %v86
      %v88 = vsel %vm78, %v85, 0.0
      %v89 = vsel %vm79, %v87, 0.0
      %v90 = vsel %vm55, %v88, 0.0
      %v91 = vsel %vm55, %v89, 0.0
      %v92 = vadd.f32 %v90, %v91
      %93 = vadd.xlane.f32.xlu0 %v92
      %v94 = vpop.xlane.xlu0 %93
      %v95 = vrot.slane %v94, 4
      %v96 = vadd.f32 %v94, %v95
      %v97 = vrot.slane %v96, 2
      %v98 = vadd.f32 %v96, %v97
      %v99 = vrot.slane %v98, 1
      %v100 = vadd.f32 %v98, %v99
      %s101 = vtos %v100
      %v102 = vstv %s101
      %103 = vst [vmem:[#allocation4] sm:$0xff] %v102
    $region17: #{tpu_custom_call.1} parent=1 // pred_fallthru
      _
    // Predicated region
    $region18: #{tpu_custom_call.1} parent=1 // pred_check
      _
    $region19: #{tpu_custom_call.1} parent=1 // pred_check_branch
      %105 = sbr.rel (0) target = $region21
    $region20: #{tpu_custom_call.1} parent=1 // pred_region
      %s107 = ssub.s32 128, 128
      %108 = vsyncadd [#allocation5], %s107
      %s110 = sshll.u32 [#allocation4], 4
      %s111 = int_to_ptr.vmem [resolvable:$true] %s110
      %113 = dma.vmem_to_hbm [thread:$0]  %s111, 128, %s2, [#allocation5]
    $region21: #{tpu_custom_call.1} parent=1 // pred_fallthru
      _
    // Predicated region
    $region22: #{tpu_custom_call.1} parent=1 // pred_check
      _
    $region23: #{tpu_custom_call.1} parent=1 // pred_check_branch
      %115 = sbr.rel (0) target = $region25
    $region24: #{tpu_custom_call.1} parent=1 // pred_region
      %116 = dma.done [#allocation5], 128
    $region25: #{tpu_custom_call.1} parent=1 // pred_fallthru
      _
    %117 = vsyncpa [#allocation5], 1

</llo_original>
